<compile_context>
chip_gen: v6e
topology: v6e:2x2x1
jax: 0.10.0
libtpu: 0.0.40
codegen_flags: <defaults>
</compile_context>

<pallas_src>
import functools

import jax
import jax.numpy as jnp
from jax.experimental import pallas as pl
from jax.experimental.pallas import tpu as pltpu


# -------------------- kernel 1: per-channel spatial mean --------------------

def _mean_kernel(x_ref, o_ref, *, hw_total, hw_tile, ragged):
    # x_ref: (row_tile, hw_tile) block of the (B*C, H*W) flattened input
    # o_ref: (row_tile, 1) f32 block, revisited across the hw axis (accumulator)
    t = pl.program_id(1)

    @pl.when(t == 0)
    def _():
        o_ref[...] = jnp.zeros_like(o_ref)

    xv = x_ref[...].astype(jnp.float32)
    if ragged:  # zero the padded lane tail of the last (partial) spatial tile
        lane = jax.lax.broadcasted_iota(jnp.int32, xv.shape, 1)
        xv = jnp.where(t * hw_tile + lane < hw_total, xv, 0.0)

    o_ref[...] += jnp.sum(xv, axis=-1, keepdims=True)

    @pl.when(t == pl.num_programs(1) - 1)
    def _():
        o_ref[...] = o_ref[...] * (1.0 / float(hw_total))


def _choose_tiles(rows, hw, max_block_bytes=4 * 1024 * 1024):
    # Keep one (row_tile, hw_tile) f32 input block <= ~4 MiB so the double-buffered
    # pair stays well inside the default scoped VMEM on every generation (incl. v7x).
    row_tile = rows if rows <= 1024 else 1024               # multiple of 8 when tiled
    budget = max(128, max_block_bytes // (4 * row_tile))
    hw_tile = hw if hw <= budget else max(128, (budget // 128) * 128)
    return row_tile, hw_tile


# -------------------- kernel 2: top-3 channel gather --------------------

def _gather_kernel(idx_ref, x_hbm, o_ref, sem):
    # idx_ref: (B, 3) int32 in SMEM (scalar prefetch)
    # x_hbm  : whole (B, C, HW) input left in HBM (memory_space=pl.ANY)
    # o_ref  : (1, 3, HW) VMEM output block for batch b (lane-dense writeback)
    # sem    : (3,) DMA semaphores — three concurrent channel copies per batch
    b = pl.program_id(0)
    copies = []
    for j in range(3):
        c = idx_ref[b, j]
        cp = pltpu.make_async_copy(
            x_hbm.at[b, pl.ds(c, 1), :],      # (1, HW) channel c of batch b
            o_ref.at[0, pl.ds(j, 1), :],      # (1, HW) row j of the output block
            sem.at[j])
        cp.start()
        copies.append(cp)
    for cp in copies:
        cp.wait()


# -------------------- wrapper --------------------

def eca_layer_forward(x, conv_w):
    """Pallas version of eca_layer.forward.

    x:      (B, C, H, W) float32, NCHW as in PyTorch (C >= 3).
    conv_w: (1, 1, k) float32, Conv1d(1, 1, k, padding=(k-1)//2, bias=False) weight.
    """
    B, C, H, W = x.shape
    HW = H * W
    R = B * C
    x2 = x.reshape(R, HW)

    row_tile, hw_tile = _choose_tiles(R, HW)
    n_rows = pl.cdiv(R, row_tile)
    n_hw = pl.cdiv(HW, hw_tile)
    ragged = (HW % hw_tile) != 0

    kernel1 = functools.partial(
        _mean_kernel, hw_total=HW, hw_tile=hw_tile, ragged=ragged)

    means = pl.pallas_call(
        kernel1,
        out_shape=jax.ShapeDtypeStruct((R, 1), jnp.float32),
        grid=(n_rows, n_hw),
        in_specs=[pl.BlockSpec((row_tile, hw_tile), lambda r, t: (r, t))],
        out_specs=pl.BlockSpec((row_tile, 1), lambda r, t: (r, 0)),
        compiler_params=pltpu.CompilerParams(
            dimension_semantics=("parallel", "arbitrary")),
        cost_estimate=pl.CostEstimate(
            flops=R * HW, transcendentals=0,
            bytes_accessed=R * HW * x.dtype.itemsize + R * 4),
    )(x2)
    means = means.reshape(B, C)

    # Conv1d(1,1,k,padding=(k-1)//2,bias=False) over the channel axis, then top-3.
    # Softmax is skipped: it is strictly monotone, so top_k(softmax(s)) == top_k(s),
    # and the probabilities are never used beyond the ranking.
    # TODO(synk): top-k and this tiny (B, C) cross-channel conv stay in glue JAX;
    # they are O(B*C) scalar work with no profitable Pallas mapping.
    k = conv_w.shape[-1]
    pad = (k - 1) // 2
    w = conv_w.reshape(-1).astype(jnp.float32)
    mp = jnp.pad(means, ((0, 0), (pad, pad)))
    scores = sum(w[j] * mp[:, j:j + C] for j in range(k))
    _, idx = jax.lax.top_k(scores, 3)            # (B, 3), descending like torch.topk
    idx = idx.astype(jnp.int32)

    x3 = x.reshape(B, C, HW)
    out = pl.pallas_call(
        _gather_kernel,
        out_shape=jax.ShapeDtypeStruct((B, 3, HW), x.dtype),
        grid_spec=pltpu.PrefetchScalarGridSpec(
            num_scalar_prefetch=1,
            grid=(B,),
            in_specs=[pl.BlockSpec(memory_space=pl.ANY)],
            out_specs=pl.BlockSpec((1, 3, HW), lambda b, idx_ref: (b, 0, 0)),
            scratch_shapes=[pltpu.SemaphoreType.DMA((3,))]),
        compiler_params=pltpu.CompilerParams(
            dimension_semantics=("parallel",)),
        cost_estimate=pl.CostEstimate(
            flops=0, transcendentals=0,
            bytes_accessed=2 * B * 3 * HW * x.dtype.itemsize),
    )(idx, x3)
    return out.reshape(B, 3, H, W)


def eca_layer_reference(x, conv_w):
    """Pure-JAX reference of the PyTorch eca_layer.forward, for verification."""
    B, C, H, W = x.shape
    m = x.mean(axis=(2, 3))                              # AdaptiveAvgPool2d(1)
    k = conv_w.shape[-1]
    pad = (k - 1) // 2
    w = conv_w.reshape(-1)
    mp = jnp.pad(m, ((0, 0), (pad, pad)))
    s = sum(w[j] * mp[:, j:j + C] for j in range(k))     # Conv1d(1,1,k,pad,bias=False)
    p = jax.nn.softmax(s, axis=1)                        # nn.Softmax() -> dim=1
    idx = jax.lax.top_k(p, 3)[1]                         # torch.topk(..., 3, dim=1)
    return x[jnp.arange(B)[:, None], idx]                # scatter-mask * x + index_select


if __name__ == "__main__":
    key = jax.random.PRNGKey(0)
    kx, kw = jax.random.split(key)

    # NCHW input; the module's topk(..., 3) implicitly requires C >= 3.
    x = jax.random.normal(kx, (2, 4, 16, 16), dtype=jnp.float32)

    # Conv1d(1, 1, kernel_size=3, padding=1, bias=False) weight: shape (1, 1, 3).
    # PyTorch kaiming-uniform with fan_in=3 -> U(-1/sqrt(3), 1/sqrt(3)).
    bound = 1.0 / (3.0 ** 0.5)
    conv_w = jax.random.uniform(kw, (1, 1, 3), jnp.float32, -bound, bound)

    out = jax.block_until_ready(eca_layer_forward(x, conv_w))
    ref = eca_layer_reference(x, conv_w)

    assert out.shape == (2, 3, 16, 16), out.shape
    assert jnp.allclose(out, ref, atol=1e-5, rtol=1e-5), "mismatch vs reference"
    print("KERNEL_OK")
</pallas_src>

<mosaic_0001>
module attributes {stable_mosaic.version = 11 : i64} {
  func.func @_mean_kernel(%arg0: i32, %arg1: i32, %arg2: memref<8x256xf32, #tpu.memory_space<vmem>>, %arg3: memref<8x1xf32, #tpu.memory_space<vmem>>) attributes {dimension_semantics = [#tpu.dimension_semantics<parallel>, #tpu.dimension_semantics<arbitrary>], iteration_bounds = array<i64: 1, 1>, scalar_prefetch = 0 : i64, scratch_operands = 0 : i64, tpu.core_type = #tpu.core_type<tc>, window_params = [{transform_indices = @transform_0, window_bounds = array<i64: 8, 256>}, {transform_indices = @transform_1, window_bounds = array<i64: 8, 1>}]} {
    %c0_i32 = arith.constant 0 : i32
    %0 = arith.cmpi eq, %arg1, %c0_i32 : i32
    %1 = arith.extui %0 : i1 to i32
    %c0_i32_0 = arith.constant 0 : i32
    %2 = arith.cmpi ne, %1, %c0_i32_0 : i32
    scf.if %2 {
      %cst_8 = arith.constant 0.000000e+00 : f32
      %12 = vector.broadcast %cst_8 : f32 to vector<8x1xf32>
      %c0_9 = arith.constant 0 : index
      %c0_10 = arith.constant 0 : index
      %13 = vector.load %arg3[%c0_9, %c0_10] : memref<8x1xf32, #tpu.memory_space<vmem>>, vector<8x1xf32>
      tpu.vector_store %arg3[%c0_9, %c0_10], %12 {strides = array<i32>} : memref<8x1xf32, #tpu.memory_space<vmem>>, vector<8x1xf32>,
    } else {
    }
    %c0 = arith.constant 0 : index
    %c0_1 = arith.constant 0 : index
    %3 = vector.load %arg2[%c0, %c0_1] : memref<8x256xf32, #tpu.memory_space<vmem>>, vector<8x256xf32>
    %c0_2 = arith.constant 0 : index
    %c0_3 = arith.constant 0 : index
    %4 = vector.load %arg3[%c0_2, %c0_3] : memref<8x1xf32, #tpu.memory_space<vmem>>, vector<8x1xf32>
    %cst = arith.constant dense<0.000000e+00> : vector<8xf32>
    %5 = vector.multi_reduction <add>, %3, %cst [1] : vector<8x256xf32> to vector<8xf32>
    %6 = vector.shape_cast %5 : vector<8xf32> to vector<8x1xf32>
    %7 = arith.addf %4, %6 : vector<8x1xf32>
    %c0_4 = arith.constant 0 : index
    %c0_5 = arith.constant 0 : index
    %8 = vector.load %arg3[%c0_4, %c0_5] : memref<8x1xf32, #tpu.memory_space<vmem>>, vector<8x1xf32>
    tpu.vector_store %arg3[%c0_4, %c0_5], %7 {strides = array<i32>} : memref<8x1xf32, #tpu.memory_space<vmem>>, vector<8x1xf32>,
    %c0_i32_6 = arith.constant 0 : i32
    %9 = arith.cmpi eq, %arg1, %c0_i32_6 : i32
    %10 = arith.extui %9 : i1 to i32
    %c0_i32_7 = arith.constant 0 : i32
    %11 = arith.cmpi ne, %10, %c0_i32_7 : i32
    scf.if %11 {
      %c0_8 = arith.constant 0 : index
      %c0_9 = arith.constant 0 : index
      %12 = vector.load %arg3[%c0_8, %c0_9] : memref<8x1xf32, #tpu.memory_space<vmem>>, vector<8x1xf32>
      %cst_10 = arith.constant 3.906250e-03 : f32
      %13 = vector.broadcast %cst_10 : f32 to vector<8x1xf32>
      %14 = arith.mulf %12, %13 : vector<8x1xf32>
      %c0_11 = arith.constant 0 : index
      %c0_12 = arith.constant 0 : index
      %15 = vector.load %arg3[%c0_11, %c0_12] : memref<8x1xf32, #tpu.memory_space<vmem>>, vector<8x1xf32>
      tpu.vector_store %arg3[%c0_11, %c0_12], %14 {strides = array<i32>} : memref<8x1xf32, #tpu.memory_space<vmem>>, vector<8x1xf32>,
    } else {
    }
    return
  }
  func.func @transform_0(%arg0: i32, %arg1: i32) -> (i32, i32) {
    %c0_i32 = arith.constant 0 : i32
    return %arg0, %arg1 : i32, i32
  }
  func.func @transform_1(%arg0: i32, %arg1: i32) -> (i32, i32) {
    %c0_i32 = arith.constant 0 : i32
    %c0_i32_0 = arith.constant 0 : i32
    return %arg0, %c0_i32 : i32, i32
  }
}

</mosaic_0001>

<llo_original>
// kernel: tpu_custom_call.1
$region0: #{tpu_custom_call.1}
  #allocation0 [shape = 'u32[]', space=smem, size = 0x4, offset = 0x4, fixed_abs, tag = 'smem constant byte address 0x4 - core index']
  #allocation1 [shape = 'u32[144,128]{1,0:T(1,128)}', space=vmem, size = 0x12000, scoped, tag = 'internal scratch']
  %s0 = inlined_call_operand.hbm [shape: f32[8,256], index: 0, kind: input, shape index: {}]
  %s1 = inlined_call_operand.vmem [shape: f32[8,1], index: 1, kind: output, shape index: {}]
  %s2 = sld [smem:[#allocation0]]
  $region26: #{tpu_custom_call.1} parent=0
    _
  %s4 = ssub.s32 1, %s2
  %s5 = scalar_select 0, %s4, %s2
  $region1: #{tpu_custom_call.1} parent=0
    #allocation2 [shape = 'u8[8192]{0}', space=vmem, size = 0x2000, scoped, tag = 'input window, operand 0, single buffered']
    #allocation3 [shape = 's32[1]{0}', space=sflag, size = 0x4, scoped, tag = 'scoped memory for tpu_custom_call.1']
    %6 = vsyncpa [#allocation3], 0
    // Predicated region
    $region2: #{tpu_custom_call.1} parent=1 // pred_check
      _
    $region3: #{tpu_custom_call.1} parent=1 // pred_check_branch
      %8 = sbr.rel (0) target = $region5
    $region4: #{tpu_custom_call.1} parent=1 // pred_region
      %s10 = ssub.s32 256, 256
      %11 = vsyncadd [#allocation3], %s10
      %s13 = sshll.u32 [#allocation2], 4
      %s14 = int_to_ptr.vmem [resolvable:$true] %s13
      %16 = dma.hbm_to_vmem [thread:$0]  %s0, 256, %s14, [#allocation3]
    $region5: #{tpu_custom_call.1} parent=1 // pred_fallthru
      _
    // Predicated region
    $region6: #{tpu_custom_call.1} parent=1 // pred_check
      _
    $region7: #{tpu_custom_call.1} parent=1 // pred_check_branch
      %18 = sbr.rel (0) target = $region9
    $region8: #{tpu_custom_call.1} parent=1 // pred_region
      %19 = dma.done [#allocation3], 256
    $region9: #{tpu_custom_call.1} parent=1 // pred_fallthru
      _
    %p20 = scmp.eq.s32.totalorder 0, 0
    // Predicated region
    $region10: #{tpu_custom_call.1} parent=1 // pred_check
      %p21 = pneg %p20
    $region11: #{tpu_custom_call.1} parent=1 // pred_check_branch
      %23 = sbr.rel (%p21) target = $region13
    $region12: #{tpu_custom_call.1} parent=1 // pred_region
      %vm24 = vcmask 7168
      %25 = vst.msk [vmem:[%s1] sm:$0xff] %vm24, 0.0
    $region13: #{tpu_custom_call.1} parent=1 // pred_fallthru
      _
    %v26 = vld [vmem:[#allocation2] sm:$0xff]
    %v27 = vld [vmem:[#allocation2 + $0x8] sm:$0xff]
    %v28 = vld [vmem:[%s1] sm:$0xff]
    %v29 = vadd.f32 %v26, %v27
    %30 = vadd.xlane.f32.xlu0 %v29
    %v31 = vpop.xlane.xlu0 %30
    %v32 = vadd.f32 %v28, %v31
    %vm33 = vcmask 7168
    %34 = vst.msk [vmem:[%s1] sm:$0xff] %vm33, %v32
    // Predicated region
    $region14: #{tpu_custom_call.1} parent=1 // pred_check
      %p35 = pneg %p20
    $region15: #{tpu_custom_call.1} parent=1 // pred_check_branch
      %37 = sbr.rel (%p35) target = $region17
    $region16: #{tpu_custom_call.1} parent=1 // pred_region
      %v38 = vld [vmem:[%s1] sm:$0xff]
      %v39 = vmul.f32 %v38, 0.00390625
      %40 = vst.msk [vmem:[%s1] sm:$0xff] %vm33, %v39
    $region17: #{tpu_custom_call.1} parent=1 // pred_fallthru
      _
    // Predicated region
    $region18: #{tpu_custom_call.1} parent=1 // pred_check
      _
    $region19: #{tpu_custom_call.1} parent=1 // pred_check_branch
      %42 = sbr.rel (0) target = $region21
    $region20: #{tpu_custom_call.1} parent=1 // pred_region
      _
    $region21: #{tpu_custom_call.1} parent=1 // pred_fallthru
      _
    // Predicated region
    $region22: #{tpu_custom_call.1} parent=1 // pred_check
      _
    $region23: #{tpu_custom_call.1} parent=1 // pred_check_branch
      %44 = sbr.rel (0) target = $region25
    $region24: #{tpu_custom_call.1} parent=1 // pred_region
      _
    $region25: #{tpu_custom_call.1} parent=1 // pred_fallthru
      _
    %45 = vsyncpa [#allocation3], 1

</llo_original>
